<compile_context>
chip_gen: v7x
topology: tpu7x:2x2x1
jax: 0.10.0
libtpu: 0.0.40
codegen_flags: <defaults>
</compile_context>

<pallas_src>
import numpy as np
import jax
import jax.numpy as jnp
from jax.experimental import pallas as pl
from jax.experimental.pallas import tpu as pltpu

LATENT = 123          # PyTorch latent_dim
H1 = 256
H2 = 512
POOLED = H2 // 2      # 256
DEFAULT_TB = 2048     # batch tile rows (multiple of 8)


def _round_up(a, m):
    return (a + m - 1) // m * m


def _leaky(x, slope=0.2):
    return jnp.where(x > 0, x, slope * x)


def disc_kernel(x_ref, w1_ref, b1_ref, wc_ref, cb_ref, w2_ref, b2_ref,
                w3_ref, b3_ref, out_ref):
    # x tile: (TB, 123) f32 straight from HBM; cast to bf16 in-kernel.
    x = x_ref[...].astype(jnp.bfloat16)

    # Linear(123 -> 256) + bias + LeakyReLU(0.2).  f32 MXU accumulation,
    # bf16 elementwise (v6e/v7x have native bf16 VPUs).
    y = jnp.dot(x, w1_ref[...], preferred_element_type=jnp.float32)
    y = _leaky(y.astype(jnp.bfloat16) + b1_ref[...])              # (TB, 256) bf16

    # Conv1d(1, 1, 3, padding=1) folded into a banded 256x256 MXU matmul.
    y = jnp.dot(y, wc_ref[...], preferred_element_type=jnp.float32)
    y = _leaky(y.astype(jnp.bfloat16) + cb_ref[...])              # (TB, 256) bf16

    # Linear(256 -> 512) + bias.  w2/b2 columns pre-permuted to
    # [even outputs | odd outputs], so MaxPool1d(2,2) is an elementwise max of
    # the two contiguous 256-wide halves.  The surrounding LeakyReLUs fold:
    #   leaky(max(leaky(a), leaky(b))) == where(m>0, m, 0.04*m), m = max(a,b).
    y = jnp.dot(y, w2_ref[...], preferred_element_type=jnp.float32)
    y = y.astype(jnp.bfloat16) + b2_ref[...]                      # (TB, 512) bf16
    m = jnp.maximum(y[:, :POOLED], y[:, POOLED:])                 # MaxPool1d(2,2)
    y = jnp.where(m > 0, m, 0.04 * m)                             # fused leaky∘leaky

    # Linear(256 -> 1) + Sigmoid.
    z = jnp.dot(y, w3_ref[...], preferred_element_type=jnp.float32) + b3_ref[...]
    out_ref[...] = jax.nn.sigmoid(z)                              # (TB, 1) f32


def prepare_params(params):
    """One-time parameter preprocessing, hoisted out of the per-call path."""
    w1, b1, cw, cb, w2, b2, w3, b3 = params

    # Conv1d(1,1,3,pad=1) as a banded matrix:  out[j] = sum_i y[i] * Wc[i, j].
    wc = (cw[1] * jnp.eye(H1, dtype=jnp.float32)
          + cw[0] * jnp.eye(H1, k=1, dtype=jnp.float32)
          + cw[2] * jnp.eye(H1, k=-1, dtype=jnp.float32))

    # Permute Linear-2 output columns to [even | odd] so MaxPool1d(2,2) is a
    # max of two contiguous halves inside the kernel.
    perm = jnp.concatenate([jnp.arange(0, H2, 2), jnp.arange(1, H2, 2)])
    w2p = w2[:, perm]
    b2p = b2[perm]

    return (w1.astype(jnp.bfloat16),                       # (123, 256)
            b1.reshape(1, H1).astype(jnp.bfloat16),
            wc.astype(jnp.bfloat16),                       # (256, 256) banded
            jnp.full((1, H1), cb[0], jnp.bfloat16),
            w2p.astype(jnp.bfloat16),                      # (256, 512)
            b2p.reshape(1, H2).astype(jnp.bfloat16),
            w3.astype(jnp.bfloat16),                       # (256, 1)
            b3.reshape(1, 1).astype(jnp.float32))


def discriminator_forward(x, prepared, *, tb=DEFAULT_TB):
    """x: (B, 1, LATENT) float32 (PyTorch NCL). Returns (B, 1, 1) float32."""
    w1, b1, wc, cb, w2, b2, w3, b3 = prepared
    B = x.shape[0]
    x2 = x.reshape(B, LATENT).astype(jnp.float32)   # no padding / repack pass

    if B <= 8:
        # Single block whose sublane dim equals the full array dim.
        tb = B
    else:
        tb = min(int(tb), _round_up(B, 8))
        # Guarantee >= 2 grid steps so the "parallel" batch axis can shard
        # across v7x's 2 TensorCores (harmless on single-TC v5e/v6e).
        tb = max(8, min(tb, _round_up((B + 1) // 2, 8)))
    nb = -(-B // tb)
    b_pad = nb * tb          # output padded to whole tiles; input edge-padded by Pallas

    # Weights: constant block index -> VMEM-resident (DMA'd once, reused).
    def resident(shape):
        return pl.BlockSpec(shape, lambda i: (0, 0))

    out = pl.pallas_call(
        disc_kernel,
        out_shape=jax.ShapeDtypeStruct((b_pad, 1), jnp.float32),
        grid=(nb,),
        in_specs=[
            pl.BlockSpec((tb, LATENT), lambda i: (i, 0)),  # x tile (pipelined)
            resident((LATENT, H1)),                        # w1
            resident((1, H1)),                             # b1
            resident((H1, H1)),                            # conv banded matrix
            resident((1, H1)),                             # conv bias (broadcast)
            resident((H1, H2)),                            # w2 (permuted)
            resident((1, H2)),                             # b2 (permuted)
            resident((POOLED, 1)),                         # w3
            resident((1, 1)),                              # b3
        ],
        out_specs=pl.BlockSpec((tb, 1), lambda i: (i, 0)),
        compiler_params=pltpu.CompilerParams(
            dimension_semantics=("parallel",),   # shard batch tiles over TCs
            vmem_limit_bytes=48 * 1024 * 1024),
    )(x2, w1, b1, wc, cb, w2, b2, w3, b3)

    return out[:B].reshape(B, 1, 1)


def init_params(key):
    """Deterministic synthetic init (PyTorch-style uniform(+-1/sqrt(fan_in)))."""
    ks = jax.random.split(key, 8)

    def unif(k, shape, fan_in):
        b = 1.0 / np.sqrt(fan_in)
        return jax.random.uniform(k, shape, jnp.float32, -b, b)

    w1 = unif(ks[0], (LATENT, H1), LATENT)   # stored transposed (in, out)
    b1 = unif(ks[1], (H1,), LATENT)
    cw = unif(ks[2], (3,), 3)                # Conv1d(1,1,3) weight, flattened
    cb = unif(ks[3], (1,), 3)
    w2 = unif(ks[4], (H1, H2), H1)
    b2 = unif(ks[5], (H2,), H1)
    w3 = unif(ks[6], (POOLED, 1), POOLED)
    b3 = unif(ks[7], (1,), POOLED)
    return (w1, b1, cw, cb, w2, b2, w3, b3)


def reference_forward(x, params):
    """Pure-JAX f32 reference matching the PyTorch module exactly."""
    w1, b1, cw, cb, w2, b2, w3, b3 = params
    B = x.shape[0]
    y = x.reshape(B, LATENT) @ w1 + b1
    y = jnp.where(y > 0, y, 0.2 * y)
    yp = jnp.pad(y, ((0, 0), (1, 1)))
    y = cw[0] * yp[:, :-2] + cw[1] * yp[:, 1:-1] + cw[2] * yp[:, 2:] + cb[0]
    y = jnp.where(y > 0, y, 0.2 * y)
    y = y @ w2 + b2
    y = jnp.where(y > 0, y, 0.2 * y)
    y = jnp.max(y.reshape(B, POOLED, 2), axis=-1)
    y = jnp.where(y > 0, y, 0.2 * y)
    y = y @ w3 + b3
    return jax.nn.sigmoid(y).reshape(B, 1, 1)


if __name__ == "__main__":
    key = jax.random.PRNGKey(0)
    k_p, k_x1, k_x2 = jax.random.split(key, 3)
    params = init_params(k_p)
    prepared = prepare_params(params)

    # Small PyTorch-like input: (B, 1, 123) NCL.
    B = 4
    x = jax.random.normal(k_x1, (B, 1, LATENT), jnp.float32)
    out = jax.block_until_ready(discriminator_forward(x, prepared))
    ref = jax.block_until_ready(reference_forward(x, params))
    assert out.shape == (B, 1, 1)
    np.testing.assert_allclose(np.asarray(out), np.asarray(ref),
                               rtol=2e-2, atol=2e-2)  # bf16 matmul operands

    # Exercise the batch grid (multiple tiles + non-divisible tail).
    B2 = 50
    x2 = jax.random.normal(k_x2, (B2, 1, LATENT), jnp.float32)
    out2 = jax.block_until_ready(discriminator_forward(x2, prepared, tb=16))
    ref2 = jax.block_until_ready(reference_forward(x2, params))
    assert out2.shape == (B2, 1, 1)
    np.testing.assert_allclose(np.asarray(out2), np.asarray(ref2),
                               rtol=2e-2, atol=2e-2)

    print("KERNEL_OK")
</pallas_src>

<mosaic_0001>
module attributes {stable_mosaic.version = 11 : i64} {
  func.func @disc_kernel(%arg0: i32, %arg1: memref<4x123xf32, #tpu.memory_space<vmem>>, %arg2: memref<123x256xbf16, #tpu.memory_space<vmem>>, %arg3: memref<1x256xbf16, #tpu.memory_space<vmem>>, %arg4: memref<256x256xbf16, #tpu.memory_space<vmem>>, %arg5: memref<1x256xbf16, #tpu.memory_space<vmem>>, %arg6: memref<256x512xbf16, #tpu.memory_space<vmem>>, %arg7: memref<1x512xbf16, #tpu.memory_space<vmem>>, %arg8: memref<256x1xbf16, #tpu.memory_space<vmem>>, %arg9: memref<1x1xf32, #tpu.memory_space<vmem>>, %arg10: memref<4x1xf32, #tpu.memory_space<vmem>>) attributes {dimension_semantics = [#tpu.dimension_semantics<parallel>], iteration_bounds = array<i64: 1>, scalar_prefetch = 0 : i64, scratch_operands = 0 : i64, tpu.core_type = #tpu.core_type<tc>, window_params = [{transform_indices = @transform_0, window_bounds = array<i64: 4, 123>}, {pipeline_mode = #tpu.pipeline_mode<synchronous>, transform_indices = @transform_1, window_bounds = array<i64: 123, 256>}, {pipeline_mode = #tpu.pipeline_mode<synchronous>, transform_indices = @transform_2, window_bounds = array<i64: 1, 256>}, {pipeline_mode = #tpu.pipeline_mode<synchronous>, transform_indices = @transform_3, window_bounds = array<i64: 256, 256>}, {pipeline_mode = #tpu.pipeline_mode<synchronous>, transform_indices = @transform_4, window_bounds = array<i64: 1, 256>}, {pipeline_mode = #tpu.pipeline_mode<synchronous>, transform_indices = @transform_5, window_bounds = array<i64: 256, 512>}, {pipeline_mode = #tpu.pipeline_mode<synchronous>, transform_indices = @transform_6, window_bounds = array<i64: 1, 512>}, {pipeline_mode = #tpu.pipeline_mode<synchronous>, transform_indices = @transform_7, window_bounds = array<i64: 256, 1>}, {pipeline_mode = #tpu.pipeline_mode<synchronous>, transform_indices = @transform_8, window_bounds = array<i64: 1, 1>}, {transform_indices = @transform_9, window_bounds = array<i64: 4, 1>}]} {
    %c0 = arith.constant 0 : index
    %c0_0 = arith.constant 0 : index
    %0 = vector.load %arg1[%c0, %c0_0] : memref<4x123xf32, #tpu.memory_space<vmem>>, vector<4x123xf32>
    %1 = arith.truncf %0 : vector<4x123xf32> to vector<4x123xbf16>
    %c0_1 = arith.constant 0 : index
    %c0_2 = arith.constant 0 : index
    %2 = vector.load %arg2[%c0_1, %c0_2] : memref<123x256xbf16, #tpu.memory_space<vmem>>, vector<123x256xbf16>
    %cst = arith.constant dense<0.000000e+00> : vector<4x256xf32>
    %3 = tpu.matmul %1, %2, %cst {dimension_numbers = #tpu.dot_dimension_numbers<[1], [0], [0], [1], [0, 0, 1, 1], [], []>} : vector<4x123xbf16>, vector<123x256xbf16>, vector<4x256xf32> -> vector<4x256xf32>
    %4 = arith.truncf %3 : vector<4x256xf32> to vector<4x256xbf16>
    %c0_3 = arith.constant 0 : index
    %c0_4 = arith.constant 0 : index
    %5 = vector.load %arg3[%c0_3, %c0_4] : memref<1x256xbf16, #tpu.memory_space<vmem>>, vector<1x256xbf16>
    %6 = vector.broadcast %5 : vector<1x256xbf16> to vector<4x256xbf16>
    %7 = arith.addf %4, %6 : vector<4x256xbf16>
    %cst_5 = arith.constant 0.000000e+00 : bf16
    %8 = vector.broadcast %cst_5 : bf16 to vector<4x256xbf16>
    %9 = arith.cmpf ogt, %7, %8 : vector<4x256xbf16>
    %cst_6 = arith.constant 2.001950e-01 : bf16
    %10 = vector.broadcast %cst_6 : bf16 to vector<4x256xbf16>
    %11 = arith.mulf %10, %7 : vector<4x256xbf16>
    %12 = arith.select %9, %7, %11 : vector<4x256xi1>, vector<4x256xbf16>
    %c0_7 = arith.constant 0 : index
    %c0_8 = arith.constant 0 : index
    %13 = vector.load %arg4[%c0_7, %c0_8] : memref<256x256xbf16, #tpu.memory_space<vmem>>, vector<256x256xbf16>
    %cst_9 = arith.constant dense<0.000000e+00> : vector<4x256xf32>
    %14 = tpu.matmul %12, %13, %cst_9 {dimension_numbers = #tpu.dot_dimension_numbers<[1], [0], [0], [1], [0, 0, 1, 1], [], []>} : vector<4x256xbf16>, vector<256x256xbf16>, vector<4x256xf32> -> vector<4x256xf32>
    %15 = arith.truncf %14 : vector<4x256xf32> to vector<4x256xbf16>
    %c0_10 = arith.constant 0 : index
    %c0_11 = arith.constant 0 : index
    %16 = vector.load %arg5[%c0_10, %c0_11] : memref<1x256xbf16, #tpu.memory_space<vmem>>, vector<1x256xbf16>
    %17 = vector.broadcast %16 : vector<1x256xbf16> to vector<4x256xbf16>
    %18 = arith.addf %15, %17 : vector<4x256xbf16>
    %cst_12 = arith.constant 0.000000e+00 : bf16
    %19 = vector.broadcast %cst_12 : bf16 to vector<4x256xbf16>
    %20 = arith.cmpf ogt, %18, %19 : vector<4x256xbf16>
    %cst_13 = arith.constant 2.001950e-01 : bf16
    %21 = vector.broadcast %cst_13 : bf16 to vector<4x256xbf16>
    %22 = arith.mulf %21, %18 : vector<4x256xbf16>
    %23 = arith.select %20, %18, %22 : vector<4x256xi1>, vector<4x256xbf16>
    %c0_14 = arith.constant 0 : index
    %c0_15 = arith.constant 0 : index
    %24 = vector.load %arg6[%c0_14, %c0_15] : memref<256x512xbf16, #tpu.memory_space<vmem>>, vector<256x512xbf16>
    %cst_16 = arith.constant dense<0.000000e+00> : vector<4x512xf32>
    %25 = tpu.matmul %23, %24, %cst_16 {dimension_numbers = #tpu.dot_dimension_numbers<[1], [0], [0], [1], [0, 0, 1, 1], [], []>} : vector<4x256xbf16>, vector<256x512xbf16>, vector<4x512xf32> -> vector<4x512xf32>
    %26 = arith.truncf %25 : vector<4x512xf32> to vector<4x512xbf16>
    %c0_17 = arith.constant 0 : index
    %c0_18 = arith.constant 0 : index
    %27 = vector.load %arg7[%c0_17, %c0_18] : memref<1x512xbf16, #tpu.memory_space<vmem>>, vector<1x512xbf16>
    %28 = vector.broadcast %27 : vector<1x512xbf16> to vector<4x512xbf16>
    %29 = arith.addf %26, %28 : vector<4x512xbf16>
    %30 = vector.extract_strided_slice %29 {offsets = [0, 0], sizes = [4, 256], strides = [1, 1]} : vector<4x512xbf16> to vector<4x256xbf16>
    %31 = vector.extract_strided_slice %29 {offsets = [0, 256], sizes = [4, 256], strides = [1, 1]} : vector<4x512xbf16> to vector<4x256xbf16>
    %32 = arith.maximumf %30, %31 : vector<4x256xbf16>
    %cst_19 = arith.constant 0.000000e+00 : bf16
    %33 = vector.broadcast %cst_19 : bf16 to vector<4x256xbf16>
    %34 = arith.cmpf ogt, %32, %33 : vector<4x256xbf16>
    %cst_20 = arith.constant 4.003910e-02 : bf16
    %35 = vector.broadcast %cst_20 : bf16 to vector<4x256xbf16>
    %36 = arith.mulf %35, %32 : vector<4x256xbf16>
    %37 = arith.select %34, %32, %36 : vector<4x256xi1>, vector<4x256xbf16>
    %c0_21 = arith.constant 0 : index
    %c0_22 = arith.constant 0 : index
    %38 = vector.load %arg8[%c0_21, %c0_22] : memref<256x1xbf16, #tpu.memory_space<vmem>>, vector<256x1xbf16>
    %cst_23 = arith.constant dense<0.000000e+00> : vector<4x1xf32>
    %39 = tpu.matmul %37, %38, %cst_23 {dimension_numbers = #tpu.dot_dimension_numbers<[1], [0], [0], [1], [0, 0, 1, 1], [], []>} : vector<4x256xbf16>, vector<256x1xbf16>, vector<4x1xf32> -> vector<4x1xf32>
    %c0_24 = arith.constant 0 : index
    %c0_25 = arith.constant 0 : index
    %40 = vector.load %arg9[%c0_24, %c0_25] : memref<1x1xf32, #tpu.memory_space<vmem>>, vector<1x1xf32>
    %41 = vector.broadcast %40 : vector<1x1xf32> to vector<4x1xf32>
    %42 = arith.addf %39, %41 : vector<4x1xf32>
    %43 = arith.negf %42 : vector<4x1xf32>
    %44 = math.exp %43 : vector<4x1xf32>
    %cst_26 = arith.constant 1.000000e+00 : f32
    %45 = vector.broadcast %cst_26 : f32 to vector<4x1xf32>
    %46 = arith.addf %45, %44 : vector<4x1xf32>
    %47 = arith.divf %45, %46 : vector<4x1xf32>
    %c0_27 = arith.constant 0 : index
    %c0_28 = arith.constant 0 : index
    %48 = vector.load %arg10[%c0_27, %c0_28] : memref<4x1xf32, #tpu.memory_space<vmem>>, vector<4x1xf32>
    tpu.vector_store %arg10[%c0_27, %c0_28], %47 {strides = array<i32>} : memref<4x1xf32, #tpu.memory_space<vmem>>, vector<4x1xf32>,
    return
  }
  func.func @transform_0(%arg0: i32) -> (i32, i32) {
    %c0_i32 = arith.constant 0 : i32
    %c0_i32_0 = arith.constant 0 : i32
    return %arg0, %c0_i32 : i32, i32
  }
  func.func @transform_1(%arg0: i32) -> (i32, i32) {
    %c0_i32 = arith.constant 0 : i32
    %c0_i32_0 = arith.constant 0 : i32
    %c0_i32_1 = arith.constant 0 : i32
    return %c0_i32, %c0_i32_0 : i32, i32
  }
  func.func @transform_2(%arg0: i32) -> (i32, i32) {
    %c0_i32 = arith.constant 0 : i32
    %c0_i32_0 = arith.constant 0 : i32
    %c0_i32_1 = arith.constant 0 : i32
    return %c0_i32, %c0_i32_0 : i32, i32
  }
  func.func @transform_3(%arg0: i32) -> (i32, i32) {
    %c0_i32 = arith.constant 0 : i32
    %c0_i32_0 = arith.constant 0 : i32
    %c0_i32_1 = arith.constant 0 : i32
    return %c0_i32, %c0_i32_0 : i32, i32
  }
  func.func @transform_4(%arg0: i32) -> (i32, i32) {
    %c0_i32 = arith.constant 0 : i32
    %c0_i32_0 = arith.constant 0 : i32
    %c0_i32_1 = arith.constant 0 : i32
    return %c0_i32, %c0_i32_0 : i32, i32
  }
  func.func @transform_5(%arg0: i32) -> (i32, i32) {
    %c0_i32 = arith.constant 0 : i32
    %c0_i32_0 = arith.constant 0 : i32
    %c0_i32_1 = arith.constant 0 : i32
    return %c0_i32, %c0_i32_0 : i32, i32
  }
  func.func @transform_6(%arg0: i32) -> (i32, i32) {
    %c0_i32 = arith.constant 0 : i32
    %c0_i32_0 = arith.constant 0 : i32
    %c0_i32_1 = arith.constant 0 : i32
    return %c0_i32, %c0_i32_0 : i32, i32
  }
  func.func @transform_7(%arg0: i32) -> (i32, i32) {
    %c0_i32 = arith.constant 0 : i32
    %c0_i32_0 = arith.constant 0 : i32
    %c0_i32_1 = arith.constant 0 : i32
    return %c0_i32, %c0_i32_0 : i32, i32
  }
  func.func @transform_8(%arg0: i32) -> (i32, i32) {
    %c0_i32 = arith.constant 0 : i32
    %c0_i32_0 = arith.constant 0 : i32
    %c0_i32_1 = arith.constant 0 : i32
    return %c0_i32, %c0_i32_0 : i32, i32
  }
  func.func @transform_9(%arg0: i32) -> (i32, i32) {
    %c0_i32 = arith.constant 0 : i32
    %c0_i32_0 = arith.constant 0 : i32
    return %arg0, %c0_i32 : i32, i32
  }
}

</mosaic_0001>

<llo_original>
// kernel: tpu_custom_call.1
$region0: #{tpu_custom_call.1}
  #allocation0 [shape = 'u32[]', space=smem, size = 0x4, offset = 0x4, fixed_abs, tag = 'smem constant byte address 0x4 - core index']
  #allocation1 [shape = 'u32[144,128]{1,0:T(1,128)}', space=vmem, size = 0x12000, scoped, tag = 'internal scratch']
  #allocation2 [shape = 'f32[1,1]{1,0:T(1,128)S(1)}', space=vmem, size = 0x200, scoped, tag = 'scoped memory for tpu_custom_call.1']
  %s0 = inlined_call_operand.vmem [shape: f32[4,123], index: 0, kind: input, shape index: {}]
  %s1 = inlined_call_operand.vmem [shape: bf16[123,256], index: 1, kind: input, shape index: {}]
  %s2 = inlined_call_operand.vmem [shape: bf16[1,256], index: 2, kind: input, shape index: {}]
  %s3 = inlined_call_operand.hbm [shape: bf16[256,256], index: 3, kind: input, shape index: {}]
  %s4 = inlined_call_operand.vmem [shape: bf16[1,256], index: 4, kind: input, shape index: {}]
  %s5 = inlined_call_operand.hbm [shape: bf16[256,512], index: 5, kind: input, shape index: {}]
  %s6 = inlined_call_operand.vmem [shape: bf16[1,512], index: 6, kind: input, shape index: {}]
  %s7 = inlined_call_operand.vmem [shape: bf16[256,1], index: 7, kind: input, shape index: {}]
  %s8 = inlined_call_operand.<no memory space> [shape: f32[1,1], index: 8, kind: input, shape index: {}]
  %s9 = inlined_call_operand.vmem [shape: f32[4,1], index: 9, kind: output, shape index: {}]
  %s10 = sld [smem:[#allocation0]]
  $region54: #{tpu_custom_call.1} parent=0
    _
  %s12 = ssub.s32 1, %s10
  %s13 = scalar_select 0, %s12, %s10
  %v14 = vstv %s8
  %15 = vst [vmem:[#allocation2] sm:$0x1] %v14
  $region1: #{tpu_custom_call.1} parent=0
    #allocation3 [shape = 'u8[131072]{0}', space=vmem, size = 0x20000, scoped, tag = 'input window, operand 3, single buffered']
    #allocation4 [shape = 's32[1]{0}', space=sflag, size = 0x4, scoped, tag = 'scoped memory for tpu_custom_call.1']
    #allocation5 [shape = 'u8[262144]{0}', space=vmem, size = 0x40000, scoped, tag = 'input window, operand 5, single buffered']
    #allocation6 [shape = 's32[1]{0}', space=sflag, size = 0x4, scoped, tag = 'scoped memory for tpu_custom_call.1']
    %16 = vsyncpa [#allocation4], 0
    %17 = vsyncpa [#allocation6], 0
    // Predicated region
    $region2: #{tpu_custom_call.1} parent=1 // pred_check
      _
    $region3: #{tpu_custom_call.1} parent=1 // pred_check_branch
      %19 = sbr.rel (0) target = $region5
    $region4: #{tpu_custom_call.1} parent=1 // pred_region
      _
    $region5: #{tpu_custom_call.1} parent=1 // pred_fallthru
      _
    // Predicated region
    $region6: #{tpu_custom_call.1} parent=1 // pred_check
      _
    $region7: #{tpu_custom_call.1} parent=1 // pred_check_branch
      %21 = sbr.rel (0) target = $region9
    $region8: #{tpu_custom_call.1} parent=1 // pred_region
      _
    $region9: #{tpu_custom_call.1} parent=1 // pred_fallthru
      _
    // Predicated region
    $region10: #{tpu_custom_call.1} parent=1 // pred_check
      _
    $region11: #{tpu_custom_call.1} parent=1 // pred_check_branch
      %23 = sbr.rel (0) target = $region13
    $region12: #{tpu_custom_call.1} parent=1 // pred_region
      _
    $region13: #{tpu_custom_call.1} parent=1 // pred_fallthru
      _
    // Predicated region
    $region14: #{tpu_custom_call.1} parent=1 // pred_check
      _
    $region15: #{tpu_custom_call.1} parent=1 // pred_check_branch
      %25 = sbr.rel (0) target = $region17
    $region16: #{tpu_custom_call.1} parent=1 // pred_region
      %s27 = ssub.s32 4096, 4096
      %28 = vsyncadd [#allocation4], %s27
      %s29 = sshll.u32 [#allocation3], 4
      %s30 = int_to_ptr.vmem [resolvable:$true] %s29
      %35 = dma.hbm_to_vmem [thread:$0]  %s3, 4096, %s30, [#allocation4], 128, 128, 8
    $region17: #{tpu_custom_call.1} parent=1 // pred_fallthru
      _
    // Predicated region
    $region18: #{tpu_custom_call.1} parent=1 // pred_check
      _
    $region19: #{tpu_custom_call.1} parent=1 // pred_check_branch
      %37 = sbr.rel (0) target = $region21
    $region20: #{tpu_custom_call.1} parent=1 // pred_region
      _
    $region21: #{tpu_custom_call.1} parent=1 // pred_fallthru
      _
    // Predicated region
    $region22: #{tpu_custom_call.1} parent=1 // pred_check
      _
    $region23: #{tpu_custom_call.1} parent=1 // pred_check_branch
      %39 = sbr.rel (0) target = $region25
    $region24: #{tpu_custom_call.1} parent=1 // pred_region
      %s41 = ssub.s32 8192, 8192
      %42 = vsyncadd [#allocation6], %s41
      %s43 = sshll.u32 [#allocation5], 4
      %s44 = int_to_ptr.vmem [resolvable:$true] %s43
      %49 = dma.hbm_to_vmem [thread:$0]  %s5, 8192, %s44, [#allocation6], 256, 256, 16
    $region25: #{tpu_custom_call.1} parent=1 // pred_fallthru
      _
    // Predicated region
    $region26: #{tpu_custom_call.1} parent=1 // pred_check
      _
    $region27: #{tpu_custom_call.1} parent=1 // pred_check_branch
      %51 = sbr.rel (0) target = $region29
    $region28: #{tpu_custom_call.1} parent=1 // pred_region
      _
    $region29: #{tpu_custom_call.1} parent=1 // pred_fallthru
      _
    // Predicated region
    $region30: #{tpu_custom_call.1} parent=1 // pred_check
      _
    $region31: #{tpu_custom_call.1} parent=1 // pred_check_branch
      %53 = sbr.rel (0) target = $region33
    $region32: #{tpu_custom_call.1} parent=1 // pred_region
      _
    $region33: #{tpu_custom_call.1} parent=1 // pred_fallthru
      _
    // Predicated region
    $region34: #{tpu_custom_call.1} parent=1 // pred_check
      _
    $region35: #{tpu_custom_call.1} parent=1 // pred_check_branch
      %55 = sbr.rel (0) target = $region37
    $region36: #{tpu_custom_call.1} parent=1 // pred_region
      _
    $region37: #{tpu_custom_call.1} parent=1 // pred_fallthru
      _
    // Predicated region
    $region38: #{tpu_custom_call.1} parent=1 // pred_check
      _
    $region39: #{tpu_custom_call.1} parent=1 // pred_check_branch
      %57 = sbr.rel (0) target = $region41
    $region40: #{tpu_custom_call.1} parent=1 // pred_region
      %58 = dma.done [#allocation4], 4096
    $region41: #{tpu_custom_call.1} parent=1 // pred_fallthru
      _
    // Predicated region
    $region42: #{tpu_custom_call.1} parent=1 // pred_check
      _
    $region43: #{tpu_custom_call.1} parent=1 // pred_check_branch
      %60 = sbr.rel (0) target = $region45
    $region44: #{tpu_custom_call.1} parent=1 // pred_region
      %61 = dma.done [#allocation6], 8192
    $region45: #{tpu_custom_call.1} parent=1 // pred_fallthru
      _
    %v65 = vld [vmem:[%s0] sm:$0xf]
    %v66 = vpack.c.bf16 %v65, %v65
    %v67 = vld [vmem:[%s1] sm:$0xff]
    %v68 = vld [vmem:[%s1 + $0x8] sm:$0xff]
    %v69 = vld [vmem:[%s1 + $0x10] sm:$0xff]
    %v70 = vld [vmem:[%s1 + $0x18] sm:$0xff]
    %v71 = vld [vmem:[%s1 + $0x20] sm:$0xff]
    %v72 = vld [vmem:[%s1 + $0x28] sm:$0xff]
    %v73 = vld [vmem:[%s1 + $0x30] sm:$0xff]
    %v74 = vld [vmem:[%s1 + $0x38] sm:$0xff]
    %v75 = vld [vmem:[%s1 + $0x40] sm:$0xff]
    %v76 = vld [vmem:[%s1 + $0x48] sm:$0xff]
    %v77 = vld [vmem:[%s1 + $0x50] sm:$0xff]
    %v78 = vld [vmem:[%s1 + $0x58] sm:$0xff]
    %v79 = vld [vmem:[%s1 + $0x60] sm:$0xff]
    %v80 = vld [vmem:[%s1 + $0x68] sm:$0xff]
    %v81 = vld [vmem:[%s1 + $0x70] sm:$0xff]
    %v82 = vld [vmem:[%s1 + $0x78] sm:$0x33]
    %v99 = vunpack.c.l.b16 %v67
    %v100 = vunpack.c.h.b16 %v67
    %v101 = vunpack.c.l.b16 %v68
    %v102 = vunpack.c.h.b16 %v68
    %v103 = vunpack.c.l.b16 %v69
    %v104 = vunpack.c.h.b16 %v69
    %v105 = vunpack.c.l.b16 %v70
    %v106 = vunpack.c.h.b16 %v70
    %v107 = vunpack.c.l.b16 %v71
    %v108 = vunpack.c.h.b16 %v71
    %v109 = vunpack.c.l.b16 %v72
    %v110 = vunpack.c.h.b16 %v72
    %v111 = vunpack.c.l.b16 %v73
    %v112 = vunpack.c.h.b16 %v73
    %v113 = vunpack.c.l.b16 %v74
    %v114 = vunpack.c.h.b16 %v74
    %v115 = vunpack.c.l.b16 %v75
    %v116 = vunpack.c.h.b16 %v75
    %v117 = vunpack.c.l.b16 %v76
    %v118 = vunpack.c.h.b16 %v76
    %v119 = vunpack.c.l.b16 %v77
    %v120 = vunpack.c.h.b16 %v77
    %v121 = vunpack.c.l.b16 %v78
    %v122 = vunpack.c.h.b16 %v78
    %v123 = vunpack.c.l.b16 %v79
    %v124 = vunpack.c.h.b16 %v79
    %v125 = vunpack.c.l.b16 %v80
    %v126 = vunpack.c.h.b16 %v80
    %v127 = vunpack.c.l.b16 %v81
    %v128 = vunpack.c.h.b16 %v81
    %v129 = vunpack.c.l.b16 %v82
    %v130 = vunpack.c.h.b16 %v82
    %v131 = vpack.c.b16 %v101, %v99
    %v132 = vpack.c.b16 %v102, %v100
    %v133 = vpack.c.b16 %v105, %v103
    %v134 = vpack.c.b16 %v106, %v104
    %v135 = vpack.c.b16 %v109, %v107
    %v136 = vpack.c.b16 %v110, %v108
    %v137 = vpack.c.b16 %v113, %v111
    %v138 = vpack.c.b16 %v114, %v112
    %v139 = vpack.c.b16 %v117, %v115
    %v140 = vpack.c.b16 %v118, %v116
    %v141 = vpack.c.b16 %v121, %v119
    %v142 = vpack.c.b16 %v122, %v120
    %v143 = vpack.c.b16 %v125, %v123
    %v144 = vpack.c.b16 %v126, %v124
    %v145 = vpack.c.b16 %v129, %v127
    %v146 = vpack.c.b16 %v130, %v128
    %vm161 = vcmask 1006592
    %v163 = vsel %vm161, %v66, 0
    %vm165 = vcmask 1044480
    %vm166 = vcmask 1045504
    %v167 = vsel %vm165, 4294967295, 65535
    %v168 = vsel %vm166, %v167, 0
    %v170 = vand.u32 %v145, %v168
    %v173 = vand.u32 %v146, %v168
    %175 = vmatprep.subr.bf16.mxu0 %v132
    %176 = vmatpush1.bf16.msra.mxu0 %v131
    %177 = vmatprep.subr.bf16.mxu0 %v134
    %178 = vmatpush1.bf16.msra.mxu0 %v133
    %179 = vmatprep.subr.bf16.mxu0 %v136
    %180 = vmatpush1.bf16.msra.mxu0 %v135
    %181 = vmatprep.subr.bf16.mxu0 %v138
    %182 = vmatpush1.bf16.msra.mxu0 %v137
    %183 = vmatprep.subr.bf16.mxu0 %v140
    %184 = vmatpush1.bf16.msra.mxu0 %v139
    %185 = vmatprep.subr.bf16.mxu0 %v142
    %186 = vmatpush1.bf16.msra.mxu0 %v141
    %187 = vmatprep.subr.bf16.mxu0 %v144
    %188 = vmatpush1.bf16.msra.mxu0 %v143
    %189 = vmatprep.subr.bf16.mxu0 %v173
    %190 = vmatpush1.bf16.msra.mxu0 %v170
    %191 = vmatprep.subr.bf16.mxu0 0
    %192 = vmatpush1.bf16.msra.mxu0 0
    %193 = vmatprep.subr.bf16.mxu0 0
    %194 = vmatpush1.bf16.msra.mxu0 0
    %195 = vmatprep.subr.bf16.mxu0 0
    %196 = vmatpush1.bf16.msra.mxu0 0
    %197 = vmatprep.subr.bf16.mxu0 0
    %198 = vmatpush1.bf16.msra.mxu0 0
    %199 = vmatprep.subr.bf16.mxu0 0
    %200 = vmatpush1.bf16.msra.mxu0 0
    %201 = vmatprep.subr.bf16.mxu0 0
    %202 = vmatpush1.bf16.msra.mxu0 0
    %203 = vmatprep.subr.bf16.mxu0 0
    %204 = vmatpush1.bf16.msra.mxu0 0
    %205 = vmatprep.subr.bf16.mxu0 0
    %206 = vmatpush1.bf16.msra.mxu0 0
    %207 = vmatprep.mubr.bf16.mxu0 0
    %208 = vmatmul.mubr.bf16.gmra.mrb[0].mxu0 %v163
    %v209 = vpop.f32.mrb[0].mxu0
    %v210 = vadd.f32 0.0, %v209
    %v211 = vpop.f32.mrb[0].mxu0
    %v212 = vadd.f32 0.0, %v211
    %v213 = vpop.f32.mrb[0].mxu0
    %v214 = vpop.f32.mrb[0].mxu0
    %215 = vdwg.mxu0
    %v216 = vpack.c.bf16 %v210, %v210
    %v217 = vpack.c.bf16 %v212, %v212
    %v218 = vld [vmem:[%s2] sm:$0x3]
    %v221 = vunpack.c.l.s4 1966171168
    %v222 = vunpack.c.0.s8 %v221
    %v223 = vlaneseq
    %v224 = vshrl.u32 %v223, 7
    %v225 = vsub.s32 %v222, %v224
    %v226 = vrot.slane %v218, %v225
    %v227 = vcombine.high %v226, %v226
    %v229 = vunpack.c.l.s4 1966171168
    %v230 = vunpack.c.0.s8 %v229
    %v231 = vlaneseq
    %v232 = vshrl.u32 %v231, 7
    %v233 = vsub.s32 %v230, %v232
    %v234 = vrot.slane %v226, %v233
    %v236 = vunpack.c.l.s4 1966171168
    %v237 = vunpack.c.0.s8 %v236
    %v238 = vlaneseq
    %v239 = vshrl.u32 %v238, 7
    %v240 = vsub.s32 %v237, %v239
    %v241 = vrot.slane %v227, %v240
    %v243 = vpack.i.b16 %v234, %v234
    %v245 = vlaneseq
    %v246 = vshrl.u32 %v245, 7
    %v247 = vsub.s32 0, %v246
    %v248 = vrot.slane %v243, %v247
    %v250 = vpack.i.b16 %v241, %v241
    %v252 = vlaneseq
    %v253 = vshrl.u32 %v252, 7
    %v254 = vsub.s32 0, %v253
    %v255 = vrot.slane %v250, %v254
    %v256 = vadd.bf16 %v216, %v248
    %v257 = vadd.bf16 %v217, %v255
    %vm258 = vcmp.gt.bf16.partialorder %v256, 0
    %vm259 = vcmp.gt.bf16.partialorder %v257, 0
    %v260 = vmul.bf16 %v256, 1045249613
    %v261 = vmul.bf16 %v257, 1045249613
    %v262 = vsel %vm258, %v256, %v260
    %v263 = vsel %vm259, %v257, %v261
    %v264 = vld [vmem:[#allocation3] sm:$0xff]
    %v265 = vld [vmem:[#allocation3 + $0x8] sm:$0xff]
    %v266 = vld [vmem:[#allocation3 + $0x10] sm:$0xff]
    %v267 = vld [vmem:[#allocation3 + $0x18] sm:$0xff]
    %v268 = vld [vmem:[#allocation3 + $0x20] sm:$0xff]
    %v269 = vld [vmem:[#allocation3 + $0x28] sm:$0xff]
    %v270 = vld [vmem:[#allocation3 + $0x30] sm:$0xff]
    %v271 = vld [vmem:[#allocation3 + $0x38] sm:$0xff]
    %v272 = vld [vmem:[#allocation3 + $0x40] sm:$0xff]
    %v273 = vld [vmem:[#allocation3 + $0x48] sm:$0xff]
    %v274 = vld [vmem:[#allocation3 + $0x50] sm:$0xff]
    %v275 = vld [vmem:[#allocation3 + $0x58] sm:$0xff]
    %v276 = vld [vmem:[#allocation3 + $0x60] sm:$0xff]
    %v277 = vld [vmem:[#allocation3 + $0x68] sm:$0xff]
    %v278 = vld [vmem:[#allocation3 + $0x70] sm:$0xff]
    %v279 = vld [vmem:[#allocation3 + $0x78] sm:$0xff]
    %v280 = vld [vmem:[#allocation3 + $0x80] sm:$0xff]
    %v281 = vld [vmem:[#allocation3 + $0x88] sm:$0xff]
    %v282 = vld [vmem:[#allocation3 + $0x90] sm:$0xff]
    %v283 = vld [vmem:[#allocation3 + $0x98] sm:$0xff]
    %v284 = vld [vmem:[#allocation3 + $0xa0] sm:$0xff]
    %v285 = vld [vmem:[#allocation3 + $0xa8] sm:$0xff]
    %v286 = vld [vmem:[#allocation3 + $0xb0] sm:$0xff]
    %v287 = vld [vmem:[#allocation3 + $0xb8] sm:$0xff]
    %v288 = vld [vmem:[#allocation3 + $0xc0] sm:$0xff]
    %v289 = vld [vmem:[#allocation3 + $0xc8] sm:$0xff]
    %v290 = vld [vmem:[#allocation3 + $0xd0] sm:$0xff]
    %v291 = vld [vmem:[#allocation3 + $0xd8] sm:$0xff]
    %v292 = vld [vmem:[#allocation3 + $0xe0] sm:$0xff]
    %v293 = vld [vmem:[#allocation3 + $0xe8] sm:$0xff]
    %v294 = vld [vmem:[#allocation3 + $0xf0] sm:$0xff]
    %v295 = vld [vmem:[#allocation3 + $0xf8] sm:$0xff]
    %v328 = vunpack.c.l.b16 %v264
    %v329 = vunpack.c.h.b16 %v264
    %v330 = vunpack.c.l.b16 %v265
    %v331 = vunpack.c.h.b16 %v265
    %v332 = vunpack.c.l.b16 %v266
    %v333 = vunpack.c.h.b16 %v266
    %v334 = vunpack.c.l.b16 %v267
    %v335 = vunpack.c.h.b16 %v267
    %v336 = vunpack.c.l.b16 %v268
    %v337 = vunpack.c.h.b16 %v268
    %v338 = vunpack.c.l.b16 %v269
    %v339 = vunpack.c.h.b16 %v269
    %v340 = vunpack.c.l.b16 %v270
    %v341 = vunpack.c.h.b16 %v270
    %v342 = vunpack.c.l.b16 %v271
    %v343 = vunpack.c.h.b16 %v271
    %v344 = vunpack.c.l.b16 %v272
    %v345 = vunpack.c.h.b16 %v272
    %v346 = vunpack.c.l.b16 %v273
    %v347 = vunpack.c.h.b16 %v273
    %v348 = vunpack.c.l.b16 %v274
    %v349 = vunpack.c.h.b16 %v274
    %v350 = vunpack.c.l.b16 %v275
    %v351 = vunpack.c.h.b16 %v275
    %v352 = vunpack.c.l.b16 %v276
    %v353 = vunpack.c.h.b16 %v276
    %v354 = vunpack.c.l.b16 %v277
    %v355 = vunpack.c.h.b16 %v277
    %v356 = vunpack.c.l.b16 %v278
    %v357 = vunpack.c.h.b16 %v278
    %v358 = vunpack.c.l.b16 %v279
    %v359 = vunpack.c.h.b16 %v279
    %v360 = vunpack.c.l.b16 %v280
    %v361 = vunpack.c.h.b16 %v280
    %v362 = vunpack.c.l.b16 %v281
    %v363 = vunpack.c.h.b16 %v281
    %v364 = vunpack.c.l.b16 %v282
    %v365 = vunpack.c.h.b16 %v282
    %v366 = vunpack.c.l.b16 %v283
    %v367 = vunpack.c.h.b16 %v283
    %v368 = vunpack.c.l.b16 %v284
    %v369 = vunpack.c.h.b16 %v284
    %v370 = vunpack.c.l.b16 %v285
    %v371 = vunpack.c.h.b16 %v285
    %v372 = vunpack.c.l.b16 %v286
    %v373 = vunpack.c.h.b16 %v286
    %v374 = vunpack.c.l.b16 %v287
    %v375 = vunpack.c.h.b16 %v287
    %v376 = vunpack.c.l.b16 %v288
    %v377 = vunpack.c.h.b16 %v288
    %v378 = vunpack.c.l.b16 %v289
    %v379 = vunpack.c.h.b16 %v289
    %v380 = vunpack.c.l.b16 %v290
    %v381 = vunpack.c.h.b16 %v290
    %v382 = vunpack.c.l.b16 %v291
    %v383 = vunpack.c.h.b16 %v291
    %v384 = vunpack.c.l.b16 %v292
    %v385 = vunpack.c.h.b16 %v292
    %v386 = vunpack.c.l.b16 %v293
    %v387 = vunpack.c.h.b16 %v293
    %v388 = vunpack.c.l.b16 %v294
    %v389 = vunpack.c.h.b16 %v294
    %v390 = vunpack.c.l.b16 %v295
    %v391 = vunpack.c.h.b16 %v295
    %v392 = vpack.c.b16 %v330, %v328
    %v393 = vpack.c.b16 %v331, %v329
    %v394 = vpack.c.b16 %v334, %v332
    %v395 = vpack.c.b16 %v335, %v333
    %v396 = vpack.c.b16 %v338, %v336
    %v397 = vpack.c.b16 %v339, %v337
    %v398 = vpack.c.b16 %v342, %v340
    %v399 = vpack.c.b16 %v343, %v341
    %v400 = vpack.c.b16 %v346, %v344
    %v401 = vpack.c.b16 %v347, %v345
    %v402 = vpack.c.b16 %v350, %v348
    %v403 = vpack.c.b16 %v351, %v349
    %v404 = vpack.c.b16 %v354, %v352
    %v405 = vpack.c.b16 %v355, %v353
    %v406 = vpack.c.b16 %v358, %v356
    %v407 = vpack.c.b16 %v359, %v357
    %v408 = vpack.c.b16 %v362, %v360
    %v409 = vpack.c.b16 %v363, %v361
    %v410 = vpack.c.b16 %v366, %v364
    %v411 = vpack.c.b16 %v367, %v365
    %v412 = vpack.c.b16 %v370, %v368
    %v413 = vpack.c.b16 %v371, %v369
    %v414 = vpack.c.b16 %v374, %v372
    %v415 = vpack.c.b16 %v375, %v373
    %v416 = vpack.c.b16 %v378, %v376
    %v417 = vpack.c.b16 %v379, %v377
    %v418 = vpack.c.b16 %v382, %v380
    %v419 = vpack.c.b16 %v383, %v381
    %v420 = vpack.c.b16 %v386, %v384
    %v421 = vpack.c.b16 %v387, %v385
    %v422 = vpack.c.b16 %v390, %v388
    %v423 = vpack.c.b16 %v391, %v389
    %456 = vmatprep.subr.bf16.mxu0 %v393
    %457 = vmatpush1.bf16.msra.mxu0 %v392
    %458 = vmatprep.subr.bf16.mxu0 %v395
    %459 = vmatpush1.bf16.msra.mxu0 %v394
    %460 = vmatprep.subr.bf16.mxu0 %v397
    %461 = vmatpush1.bf16.msra.mxu0 %v396
    %462 = vmatprep.subr.bf16.mxu0 %v399
    %463 = vmatpush1.bf16.msra.mxu0 %v398
    %464 = vmatprep.subr.bf16.mxu0 %v401
    %465 = vmatpush1.bf16.msra.mxu0 %v400
    %466 = vmatprep.subr.bf16.mxu0 %v403
    %467 = vmatpush1.bf16.msra.mxu0 %v402
    %468 = vmatprep.subr.bf16.mxu0 %v405
    %469 = vmatpush1.bf16.msra.mxu0 %v404
    %470 = vmatprep.subr.bf16.mxu0 %v407
    %471 = vmatpush1.bf16.msra.mxu0 %v406
    %472 = vmatprep.subr.bf16.mxu0 %v409
    %473 = vmatpush1.bf16.msra.mxu0 %v408
    %474 = vmatprep.subr.bf16.mxu0 %v411
    %475 = vmatpush1.bf16.msra.mxu0 %v410
    %476 = vmatprep.subr.bf16.mxu0 %v413
    %477 = vmatpush1.bf16.msra.mxu0 %v412
    %478 = vmatprep.subr.bf16.mxu0 %v415
    %479 = vmatpush1.bf16.msra.mxu0 %v414
    %480 = vmatprep.subr.bf16.mxu0 %v417
    %481 = vmatpush1.bf16.msra.mxu0 %v416
    %482 = vmatprep.subr.bf16.mxu0 %v419
    %483 = vmatpush1.bf16.msra.mxu0 %v418
    %484 = vmatprep.subr.bf16.mxu0 %v421
    %485 = vmatpush1.bf16.msra.mxu0 %v420
    %486 = vmatprep.subr.bf16.mxu0 %v423
    %487 = vmatpush1.bf16.msra.mxu0 %v422
    %488 = vmatprep.mubr.bf16.mxu0 %v263
    %489 = vmatmul.mubr.bf16.gmra.mrb[0].mxu0 %v262
    %v490 = vpop.f32.mrb[0].mxu0
    %v491 = vadd.f32 0.0, %v490
    %v492 = vpop.f32.mrb[0].mxu0
    %v493 = vadd.f32 0.0, %v492
    %v494 = vpop.f32.mrb[0].mxu0
    %v495 = vpop.f32.mrb[0].mxu0
    %496 = vdwg.mxu0
    %v497 = vpack.c.bf16 %v491, %v491
    %v498 = vpack.c.bf16 %v493, %v493
    %v499 = vld [vmem:[%s4] sm:$0x3]
    %v502 = vunpack.c.l.s4 1966171168
    %v503 = vunpack.c.0.s8 %v502
    %v504 = vlaneseq
    %v505 = vshrl.u32 %v504, 7
    %v506 = vsub.s32 %v503, %v505
    %v507 = vrot.slane %v499, %v506
    %v508 = vcombine.high %v507, %v507
    %v510 = vunpack.c.l.s4 1966171168
    %v511 = vunpack.c.0.s8 %v510
    %v512 = vlaneseq
    %v513 = vshrl.u32 %v512, 7
    %v514 = vsub.s32 %v511, %v513
    %v515 = vrot.slane %v507, %v514
    %v517 = vunpack.c.l.s4 1966171168
    %v518 = vunpack.c.0.s8 %v517
    %v519 = vlaneseq
    %v520 = vshrl.u32 %v519, 7
    %v521 = vsub.s32 %v518, %v520
    %v522 = vrot.slane %v508, %v521
    %v524 = vpack.i.b16 %v515, %v515
    %v526 = vlaneseq
    %v527 = vshrl.u32 %v526, 7
    %v528 = vsub.s32 0, %v527
    %v529 = vrot.slane %v524, %v528
    %v531 = vpack.i.b16 %v522, %v522
    %v533 = vlaneseq
    %v534 = vshrl.u32 %v533, 7
    %v535 = vsub.s32 0, %v534
    %v536 = vrot.slane %v531, %v535
    %v537 = vadd.bf16 %v497, %v529
    %v538 = vadd.bf16 %v498, %v536
    %vm539 = vcmp.gt.bf16.partialorder %v537, 0
    %vm540 = vcmp.gt.bf16.partialorder %v538, 0
    %v541 = vmul.bf16 %v537, 1045249613
    %v542 = vmul.bf16 %v538, 1045249613
    %v543 = vsel %vm539, %v537, %v541
    %v544 = vsel %vm540, %v538, %v542
    %v545 = vld [vmem:[#allocation5] sm:$0xff]
    %v546 = vld [vmem:[#allocation5 + $0x8] sm:$0xff]
    %v547 = vld [vmem:[#allocation5 + $0x10] sm:$0xff]
    %v548 = vld [vmem:[#allocation5 + $0x18] sm:$0xff]
    %v549 = vld [vmem:[#allocation5 + $0x20] sm:$0xff]
    %v550 = vld [vmem:[#allocation5 + $0x28] sm:$0xff]
    %v551 = vld [vmem:[#allocation5 + $0x30] sm:$0xff]
    %v552 = vld [vmem:[#allocation5 + $0x38] sm:$0xff]
    %v553 = vld [vmem:[#allocation5 + $0x40] sm:$0xff]
    %v554 = vld [vmem:[#allocation5 + $0x48] sm:$0xff]
    %v555 = vld [vmem:[#allocation5 + $0x50] sm:$0xff]
    %v556 = vld [vmem:[#allocation5 + $0x58] sm:$0xff]
    %v557 = vld [vmem:[#allocation5 + $0x60] sm:$0xff]
    %v558 = vld [vmem:[#allocation5 + $0x68] sm:$0xff]
    %v559 = vld [vmem:[#allocation5 + $0x70] sm:$0xff]
    %v560 = vld [vmem:[#allocation5 + $0x78] sm:$0xff]
    %v561 = vld [vmem:[#allocation5 + $0x80] sm:$0xff]
    %v562 = vld [vmem:[#allocation5 + $0x88] sm:$0xff]
    %v563 = vld [vmem:[#allocation5 + $0x90] sm:$0xff]
    %v564 = vld [vmem:[#allocation5 + $0x98] sm:$0xff]
    %v565 = vld [vmem:[#allocation5 + $0xa0] sm:$0xff]
    %v566 = vld [vmem:[#allocation5 + $0xa8] sm:$0xff]
    %v567 = vld [vmem:[#allocation5 + $0xb0] sm:$0xff]
    %v568 = vld [vmem:[#allocation5 + $0xb8] sm:$0xff]
    %v569 = vld [vmem:[#allocation5 + $0xc0] sm:$0xff]
    %v570 = vld [vmem:[#allocation5 + $0xc8] sm:$0xff]
    %v571 = vld [vmem:[#allocation5 + $0xd0] sm:$0xff]
    %v572 = vld [vmem:[#allocation5 + $0xd8] sm:$0xff]
    %v573 = vld [vmem:[#allocation5 + $0xe0] sm:$0xff]
    %v574 = vld [vmem:[#allocation5 + $0xe8] sm:$0xff]
    %v575 = vld [vmem:[#allocation5 + $0xf0] sm:$0xff]
    %v576 = vld [vmem:[#allocation5 + $0xf8] sm:$0xff]
    %v577 = vld [vmem:[#allocation5 + $0x100] sm:$0xff]
    %v578 = vld [vmem:[#allocation5 + $0x108] sm:$0xff]
    %v579 = vld [vmem:[#allocation5 + $0x110] sm:$0xff]
    %v580 = vld [vmem:[#allocation5 + $0x118] sm:$0xff]
    %v581 = vld [vmem:[#allocation5 + $0x120] sm:$0xff]
    %v582 = vld [vmem:[#allocation5 + $0x128] sm:$0xff]
    %v583 = vld [vmem:[#allocation5 + $0x130] sm:$0xff]
    %v584 = vld [vmem:[#allocation5 + $0x138] sm:$0xff]
    %v585 = vld [vmem:[#allocation5 + $0x140] sm:$0xff]
    %v586 = vld [vmem:[#allocation5 + $0x148] sm:$0xff]
    %v587 = vld [vmem:[#allocation5 + $0x150] sm:$0xff]
    %v588 = vld [vmem:[#allocation5 + $0x158] sm:$0xff]
    %v589 = vld [vmem:[#allocation5 + $0x160] sm:$0xff]
    %v590 = vld [vmem:[#allocation5 + $0x168] sm:$0xff]
    %v591 = vld [vmem:[#allocation5 + $0x170] sm:$0xff]
    %v592 = vld [vmem:[#allocation5 + $0x178] sm:$0xff]
    %v593 = vld [vmem:[#allocation5 + $0x180] sm:$0xff]
    %v594 = vld [vmem:[#allocation5 + $0x188] sm:$0xff]
    %v595 = vld [vmem:[#allocation5 + $0x190] sm:$0xff]
    %v596 = vld [vmem:[#allocation5 + $0x198] sm:$0xff]
    %v597 = vld [vmem:[#allocation5 + $0x1a0] sm:$0xff]
    %v598 = vld [vmem:[#allocation5 + $0x1a8] sm:$0xff]
    %v599 = vld [vmem:[#allocation5 + $0x1b0] sm:$0xff]
    %v600 = vld [vmem:[#allocation5 + $0x1b8] sm:$0xff]
    %v601 = vld [vmem:[#allocation5 + $0x1c0] sm:$0xff]
    %v602 = vld [vmem:[#allocation5 + $0x1c8] sm:$0xff]
    %v603 = vld [vmem:[#allocation5 + $0x1d0] sm:$0xff]
    %v604 = vld [vmem:[#allocation5 + $0x1d8] sm:$0xff]
    %v605 = vld [vmem:[#allocation5 + $0x1e0] sm:$0xff]
    %v606 = vld [vmem:[#allocation5 + $0x1e8] sm:$0xff]
    %v607 = vld [vmem:[#allocation5 + $0x1f0] sm:$0xff]
    %v608 = vld [vmem:[#allocation5 + $0x1f8] sm:$0xff]
    %v673 = vunpack.c.l.b16 %v545
    %v674 = vunpack.c.h.b16 %v545
    %v675 = vunpack.c.l.b16 %v546
    %v676 = vunpack.c.h.b16 %v546
    %v677 = vunpack.c.l.b16 %v547
    %v678 = vunpack.c.h.b16 %v547
    %v679 = vunpack.c.l.b16 %v548
    %v680 = vunpack.c.h.b16 %v548
    %v681 = vunpack.c.l.b16 %v549
    %v682 = vunpack.c.h.b16 %v549
    %v683 = vunpack.c.l.b16 %v550
    %v684 = vunpack.c.h.b16 %v550
    %v685 = vunpack.c.l.b16 %v551
    %v686 = vunpack.c.h.b16 %v551
    %v687 = vunpack.c.l.b16 %v552
    %v688 = vunpack.c.h.b16 %v552
    %v689 = vunpack.c.l.b16 %v553
    %v690 = vunpack.c.h.b16 %v553
    %v691 = vunpack.c.l.b16 %v554
    %v692 = vunpack.c.h.b16 %v554
    %v693 = vunpack.c.l.b16 %v555
    %v694 = vunpack.c.h.b16 %v555
    %v695 = vunpack.c.l.b16 %v556
    %v696 = vunpack.c.h.b16 %v556
    %v697 = vunpack.c.l.b16 %v557
    %v698 = vunpack.c.h.b16 %v557
    %v699 = vunpack.c.l.b16 %v558
    %v700 = vunpack.c.h.b16 %v558
    %v701 = vunpack.c.l.b16 %v559
    %v702 = vunpack.c.h.b16 %v559
    %v703 = vunpack.c.l.b16 %v560
    %v704 = vunpack.c.h.b16 %v560
    %v705 = vunpack.c.l.b16 %v561
    %v706 = vunpack.c.h.b16 %v561
    %v707 = vunpack.c.l.b16 %v562
    %v708 = vunpack.c.h.b16 %v562
    %v709 = vunpack.c.l.b16 %v563
    %v710 = vunpack.c.h.b16 %v563
    %v711 = vunpack.c.l.b16 %v564
    %v712 = vunpack.c.h.b16 %v564
    %v713 = vunpack.c.l.b16 %v565
    %v714 = vunpack.c.h.b16 %v565
    %v715 = vunpack.c.l.b16 %v566
    %v716 = vunpack.c.h.b16 %v566
    %v717 = vunpack.c.l.b16 %v567
    %v718 = vunpack.c.h.b16 %v567
    %v719 = vunpack.c.l.b16 %v568
    %v720 = vunpack.c.h.b16 %v568
    %v721 = vunpack.c.l.b16 %v569
    %v722 = vunpack.c.h.b16 %v569
    %v723 = vunpack.c.l.b16 %v570
    %v724 = vunpack.c.h.b16 %v570
    %v725 = vunpack.c.l.b16 %v571
    %v726 = vunpack.c.h.b16 %v571
    %v727 = vunpack.c.l.b16 %v572
    %v728 = vunpack.c.h.b16 %v572
    %v729 = vunpack.c.l.b16 %v573
    %v730 = vunpack.c.h.b16 %v573
    %v731 = vunpack.c.l.b16 %v574
    %v732 = vunpack.c.h.b16 %v574
    %v733 = vunpack.c.l.b16 %v575
    %v734 = vunpack.c.h.b16 %v575
    %v735 = vunpack.c.l.b16 %v576
    %v736 = vunpack.c.h.b16 %v576
    %v737 = vunpack.c.l.b16 %v577
    %v738 = vunpack.c.h.b16 %v577
    %v739 = vunpack.c.l.b16 %v578
    %v740 = vunpack.c.h.b16 %v578
    %v741 = vunpack.c.l.b16 %v579
    %v742 = vunpack.c.h.b16 %v579
    %v743 = vunpack.c.l.b16 %v580
    %v744 = vunpack.c.h.b16 %v580
    %v745 = vunpack.c.l.b16 %v581
    %v746 = vunpack.c.h.b16 %v581
    %v747 = vunpack.c.l.b16 %v582
    %v748 = vunpack.c.h.b16 %v582
    %v749 = vunpack.c.l.b16 %v583
    %v750 = vunpack.c.h.b16 %v583
    %v751 = vunpack.c.l.b16 %v584
    %v752 = vunpack.c.h.b16 %v584
    %v753 = vunpack.c.l.b16 %v585
    %v754 = vunpack.c.h.b16 %v585
    %v755 = vunpack.c.l.b16 %v586
    %v756 = vunpack.c.h.b16 %v586
    %v757 = vunpack.c.l.b16 %v587
    %v758 = vunpack.c.h.b16 %v587
    %v759 = vunpack.c.l.b16 %v588
    %v760 = vunpack.c.h.b16 %v588
    %v761 = vunpack.c.l.b16 %v589
    %v762 = vunpack.c.h.b16 %v589
    %v763 = vunpack.c.l.b16 %v590
    %v764 = vunpack.c.h.b16 %v590
    %v765 = vunpack.c.l.b16 %v591
    %v766 = vunpack.c.h.b16 %v591
    %v767 = vunpack.c.l.b16 %v592
    %v768 = vunpack.c.h.b16 %v592
    %v769 = vunpack.c.l.b16 %v593
    %v770 = vunpack.c.h.b16 %v593
    %v771 = vunpack.c.l.b16 %v594
    %v772 = vunpack.c.h.b16 %v594
    %v773 = vunpack.c.l.b16 %v595
    %v774 = vunpack.c.h.b16 %v595
    %v775 = vunpack.c.l.b16 %v596
    %v776 = vunpack.c.h.b16 %v596
    %v777 = vunpack.c.l.b16 %v597
    %v778 = vunpack.c.h.b16 %v597
    %v779 = vunpack.c.l.b16 %v598
    %v780 = vunpack.c.h.b16 %v598
    %v781 = vunpack.c.l.b16 %v599
    %v782 = vunpack.c.h.b16 %v599
    %v783 = vunpack.c.l.b16 %v600
    %v784 = vunpack.c.h.b16 %v600
    %v785 = vunpack.c.l.b16 %v601
    %v786 = vunpack.c.h.b16 %v601
    %v787 = vunpack.c.l.b16 %v602
    %v788 = vunpack.c.h.b16 %v602
    %v789 = vunpack.c.l.b16 %v603
    %v790 = vunpack.c.h.b16 %v603
    %v791 = vunpack.c.l.b16 %v604
    %v792 = vunpack.c.h.b16 %v604
    %v793 = vunpack.c.l.b16 %v605
    %v794 = vunpack.c.h.b16 %v605
    %v795 = vunpack.c.l.b16 %v606
    %v796 = vunpack.c.h.b16 %v606
    %v797 = vunpack.c.l.b16 %v607
    %v798 = vunpack.c.h.b16 %v607
    %v799 = vunpack.c.l.b16 %v608
    %v800 = vunpack.c.h.b16 %v608
    %v801 = vpack.c.b16 %v677, %v673
    %v802 = vpack.c.b16 %v678, %v674
    %v803 = vpack.c.b16 %v679, %v675
    %v804 = vpack.c.b16 %v680, %v676
    %v805 = vpack.c.b16 %v685, %v681
    %v806 = vpack.c.b16 %v686, %v682
    %v807 = vpack.c.b16 %v687, %v683
    %v808 = vpack.c.b16 %v688, %v684
    %v809 = vpack.c.b16 %v693, %v689
    %v810 = vpack.c.b16 %v694, %v690
    %v811 = vpack.c.b16 %v695, %v691
    %v812 = vpack.c.b16 %v696, %v692
    %v813 = vpack.c.b16 %v701, %v697
    %v814 = vpack.c.b16 %v702, %v698
    %v815 = vpack.c.b16 %v703, %v699
    %v816 = vpack.c.b16 %v704, %v700
    %v817 = vpack.c.b16 %v709, %v705
    %v818 = vpack.c.b16 %v710, %v706
    %v819 = vpack.c.b16 %v711, %v707
    %v820 = vpack.c.b16 %v712, %v708
    %v821 = vpack.c.b16 %v717, %v713
    %v822 = vpack.c.b16 %v718, %v714
    %v823 = vpack.c.b16 %v719, %v715
    %v824 = vpack.c.b16 %v720, %v716
    %v825 = vpack.c.b16 %v725, %v721
    %v826 = vpack.c.b16 %v726, %v722
    %v827 = vpack.c.b16 %v727, %v723
    %v828 = vpack.c.b16 %v728, %v724
    %v829 = vpack.c.b16 %v733, %v729
    %v830 = vpack.c.b16 %v734, %v730
    %v831 = vpack.c.b16 %v735, %v731
    %v832 = vpack.c.b16 %v736, %v732
    %v833 = vpack.c.b16 %v741, %v737
    %v834 = vpack.c.b16 %v742, %v738
    %v835 = vpack.c.b16 %v743, %v739
    %v836 = vpack.c.b16 %v744, %v740
    %v837 = vpack.c.b16 %v749, %v745
    %v838 = vpack.c.b16 %v750, %v746
    %v839 = vpack.c.b16 %v751, %v747
    %v840 = vpack.c.b16 %v752, %v748
    %v841 = vpack.c.b16 %v757, %v753
    %v842 = vpack.c.b16 %v758, %v754
    %v843 = vpack.c.b16 %v759, %v755
    %v844 = vpack.c.b16 %v760, %v756
    %v845 = vpack.c.b16 %v765, %v761
    %v846 = vpack.c.b16 %v766, %v762
    %v847 = vpack.c.b16 %v767, %v763
    %v848 = vpack.c.b16 %v768, %v764
    %v849 = vpack.c.b16 %v773, %v769
    %v850 = vpack.c.b16 %v774, %v770
    %v851 = vpack.c.b16 %v775, %v771
    %v852 = vpack.c.b16 %v776, %v772
    %v853 = vpack.c.b16 %v781, %v777
    %v854 = vpack.c.b16 %v782, %v778
    %v855 = vpack.c.b16 %v783, %v779
    %v856 = vpack.c.b16 %v784, %v780
    %v857 = vpack.c.b16 %v789, %v785
    %v858 = vpack.c.b16 %v790, %v786
    %v859 = vpack.c.b16 %v791, %v787
    %v860 = vpack.c.b16 %v792, %v788
    %v861 = vpack.c.b16 %v797, %v793
    %v862 = vpack.c.b16 %v798, %v794
    %v863 = vpack.c.b16 %v799, %v795
    %v864 = vpack.c.b16 %v800, %v796
    %929 = vmatprep.subr.bf16.mxu0 %v802
    %930 = vmatpush1.bf16.msra.mxu0 %v801
    %931 = vmatprep.subr.bf16.mxu0 %v806
    %932 = vmatpush1.bf16.msra.mxu0 %v805
    %933 = vmatprep.subr.bf16.mxu0 %v810
    %934 = vmatpush1.bf16.msra.mxu0 %v809
    %935 = vmatprep.subr.bf16.mxu0 %v814
    %936 = vmatpush1.bf16.msra.mxu0 %v813
    %937 = vmatprep.subr.bf16.mxu0 %v818
    %938 = vmatpush1.bf16.msra.mxu0 %v817
    %939 = vmatprep.subr.bf16.mxu0 %v822
    %940 = vmatpush1.bf16.msra.mxu0 %v821
    %941 = vmatprep.subr.bf16.mxu0 %v826
    %942 = vmatpush1.bf16.msra.mxu0 %v825
    %943 = vmatprep.subr.bf16.mxu0 %v830
    %944 = vmatpush1.bf16.msra.mxu0 %v829
    %945 = vmatprep.subr.bf16.mxu0 %v834
    %946 = vmatpush1.bf16.msra.mxu0 %v833
    %947 = vmatprep.subr.bf16.mxu0 %v838
    %948 = vmatpush1.bf16.msra.mxu0 %v837
    %949 = vmatprep.subr.bf16.mxu0 %v842
    %950 = vmatpush1.bf16.msra.mxu0 %v841
    %951 = vmatprep.subr.bf16.mxu0 %v846
    %952 = vmatpush1.bf16.msra.mxu0 %v845
    %953 = vmatprep.subr.bf16.mxu0 %v850
    %954 = vmatpush1.bf16.msra.mxu0 %v849
    %955 = vmatprep.subr.bf16.mxu0 %v854
    %956 = vmatpush1.bf16.msra.mxu0 %v853
    %957 = vmatprep.subr.bf16.mxu0 %v858
    %958 = vmatpush1.bf16.msra.mxu0 %v857
    %959 = vmatprep.subr.bf16.mxu0 %v862
    %960 = vmatpush1.bf16.msra.mxu0 %v861
    %961 = vmatprep.mubr.bf16.mxu0 %v544
    %962 = vmatmul.mubr.bf16.gmra.mrb[0].mxu0 %v543
    %v963 = vpop.f32.mrb[0].mxu0
    %v964 = vadd.f32 0.0, %v963
    %v965 = vpop.f32.mrb[0].mxu0
    %v966 = vadd.f32 0.0, %v965
    %v967 = vpop.f32.mrb[0].mxu0
    %v968 = vpop.f32.mrb[0].mxu0
    %969 = vdwg.mxu0
    %970 = vmatprep.subr.bf16.mxu0 %v804
    %971 = vmatpush1.bf16.msra.mxu0 %v803
    %972 = vmatprep.subr.bf16.mxu0 %v808
    %973 = vmatpush1.bf16.msra.mxu0 %v807
    %974 = vmatprep.subr.bf16.mxu0 %v812
    %975 = vmatpush1.bf16.msra.mxu0 %v811
    %976 = vmatprep.subr.bf16.mxu0 %v816
    %977 = vmatpush1.bf16.msra.mxu0 %v815
    %978 = vmatprep.subr.bf16.mxu0 %v820
    %979 = vmatpush1.bf16.msra.mxu0 %v819
    %980 = vmatprep.subr.bf16.mxu0 %v824
    %981 = vmatpush1.bf16.msra.mxu0 %v823
    %982 = vmatprep.subr.bf16.mxu0 %v828
    %983 = vmatpush1.bf16.msra.mxu0 %v827
    %984 = vmatprep.subr.bf16.mxu0 %v832
    %985 = vmatpush1.bf16.msra.mxu0 %v831
    %986 = vmatprep.subr.bf16.mxu0 %v836
    %987 = vmatpush1.bf16.msra.mxu0 %v835
    %988 = vmatprep.subr.bf16.mxu0 %v840
    %989 = vmatpush1.bf16.msra.mxu0 %v839
    %990 = vmatprep.subr.bf16.mxu0 %v844
    %991 = vmatpush1.bf16.msra.mxu0 %v843
    %992 = vmatprep.subr.bf16.mxu0 %v848
    %993 = vmatpush1.bf16.msra.mxu0 %v847
    %994 = vmatprep.subr.bf16.mxu0 %v852
    %995 = vmatpush1.bf16.msra.mxu0 %v851
    %996 = vmatprep.subr.bf16.mxu0 %v856
    %997 = vmatpush1.bf16.msra.mxu0 %v855
    %998 = vmatprep.subr.bf16.mxu0 %v860
    %999 = vmatpush1.bf16.msra.mxu0 %v859
    %1000 = vmatprep.subr.bf16.mxu0 %v864
    %1001 = vmatpush1.bf16.msra.mxu0 %v863
    %1002 = vmatprep.mubr.bf16.mxu0 %v544
    %1003 = vmatmul.mubr.bf16.gmra.mrb[0].mxu0 %v543
    %v1004 = vpop.f32.mrb[0].mxu0
    %v1005 = vadd.f32 0.0, %v1004
    %v1006 = vpop.f32.mrb[0].mxu0
    %v1007 = vadd.f32 0.0, %v1006
    %v1008 = vpop.f32.mrb[0].mxu0
    %v1009 = vpop.f32.mrb[0].mxu0
    %1010 = vdwg.mxu0
    %v1011 = vpack.c.bf16 %v964, %v964
    %v1012 = vpack.c.bf16 %v966, %v966
    %v1013 = vpack.c.bf16 %v1005, %v1005
    %v1014 = vpack.c.bf16 %v1007, %v1007
    %v1015 = vld [vmem:[%s6] sm:$0xf]
    %v1018 = vunpack.c.l.s4 1966171168
    %v1019 = vunpack.c.0.s8 %v1018
    %v1020 = vlaneseq
    %v1021 = vshrl.u32 %v1020, 7
    %v1022 = vsub.s32 %v1019, %v1021
    %v1023 = vrot.slane %v1015, %v1022
    %v1024 = vcombine.high %v1023, %v1023
    %v1026 = vunpack.c.l.s4 1966171168
    %v1027 = vunpack.c.0.s8 %v1026
    %v1028 = vlaneseq
    %v1029 = vshrl.u32 %v1028, 7
    %v1030 = vsub.s32 %v1027, %v1029
    %v1031 = vrot.slane %v1023, %v1030
    %v1033 = vunpack.c.l.s4 1966171168
    %v1034 = vunpack.c.0.s8 %v1033
    %v1035 = vlaneseq
    %v1036 = vshrl.u32 %v1035, 7
    %v1037 = vsub.s32 %v1034, %v1036
    %v1038 = vrot.slane %v1024, %v1037
    %v1039 = vcombine.high %v1031, %v1031
    %v1040 = vcombine.high %v1038, %v1038
    %v1042 = vpack.i.b16 %v1031, %v1031
    %v1044 = vlaneseq
    %v1045 = vshrl.u32 %v1044, 7
    %v1046 = vsub.s32 0, %v1045
    %v1047 = vrot.slane %v1042, %v1046
    %v1049 = vpack.i.b16 %v1038, %v1038
    %v1051 = vlaneseq
    %v1052 = vshrl.u32 %v1051, 7
    %v1053 = vsub.s32 0, %v1052
    %v1054 = vrot.slane %v1049, %v1053
    %v1056 = vpack.i.b16 %v1039, %v1039
    %v1058 = vlaneseq
    %v1059 = vshrl.u32 %v1058, 7
    %v1060 = vsub.s32 0, %v1059
    %v1061 = vrot.slane %v1056, %v1060
    %v1063 = vpack.i.b16 %v1040, %v1040
    %v1065 = vlaneseq
    %v1066 = vshrl.u32 %v1065, 7
    %v1067 = vsub.s32 0, %v1066
    %v1068 = vrot.slane %v1063, %v1067
    %v1069 = vadd.bf16 %v1011, %v1047
    %v1070 = vadd.bf16 %v1012, %v1054
    %v1071 = vadd.bf16 %v1013, %v1061
    %v1072 = vadd.bf16 %v1014, %v1068
    %v1073 = vmax.bf16 %v1069, %v1071
    %v1074 = vmax.bf16 %v1070, %v1072
    %vm1075 = vcmp.gt.bf16.partialorder %v1073, 0
    %vm1076 = vcmp.gt.bf16.partialorder %v1074, 0
    %v1077 = vmul.bf16 %v1073, 1025785124
    %v1078 = vmul.bf16 %v1074, 1025785124
    %v1079 = vsel %vm1075, %v1073, %v1077
    %v1080 = vsel %vm1076, %v1074, %v1078
    %v1081 = vld [vmem:[%s7] sm:$0xf]
    %v1082 = vld [vmem:[%s7 + $0x4] sm:$0xf]
    %v1083 = vld [vmem:[%s7 + $0x8] sm:$0xf]
    %v1084 = vld [vmem:[%s7 + $0xc] sm:$0xf]
    %v1085 = vld [vmem:[%s7 + $0x10] sm:$0xf]
    %v1086 = vld [vmem:[%s7 + $0x14] sm:$0xf]
    %v1087 = vld [vmem:[%s7 + $0x18] sm:$0xf]
    %v1088 = vld [vmem:[%s7 + $0x1c] sm:$0xf]
    %v1089 = vld [vmem:[%s7 + $0x20] sm:$0xf]
    %v1090 = vld [vmem:[%s7 + $0x24] sm:$0xf]
    %v1091 = vld [vmem:[%s7 + $0x28] sm:$0xf]
    %v1092 = vld [vmem:[%s7 + $0x2c] sm:$0xf]
    %v1093 = vld [vmem:[%s7 + $0x30] sm:$0xf]
    %v1094 = vld [vmem:[%s7 + $0x34] sm:$0xf]
    %v1095 = vld [vmem:[%s7 + $0x38] sm:$0xf]
    %v1096 = vld [vmem:[%s7 + $0x3c] sm:$0xf]
    %v1097 = vld [vmem:[%s7 + $0x40] sm:$0xf]
    %v1098 = vld [vmem:[%s7 + $0x44] sm:$0xf]
    %v1099 = vld [vmem:[%s7 + $0x48] sm:$0xf]
    %v1100 = vld [vmem:[%s7 + $0x4c] sm:$0xf]
    %v1101 = vld [vmem:[%s7 + $0x50] sm:$0xf]
    %v1102 = vld [vmem:[%s7 + $0x54] sm:$0xf]
    %v1103 = vld [vmem:[%s7 + $0x58] sm:$0xf]
    %v1104 = vld [vmem:[%s7 + $0x5c] sm:$0xf]
    %v1105 = vld [vmem:[%s7 + $0x60] sm:$0xf]
    %v1106 = vld [vmem:[%s7 + $0x64] sm:$0xf]
    %v1107 = vld [vmem:[%s7 + $0x68] sm:$0xf]
    %v1108 = vld [vmem:[%s7 + $0x6c] sm:$0xf]
    %v1109 = vld [vmem:[%s7 + $0x70] sm:$0xf]
    %v1110 = vld [vmem:[%s7 + $0x74] sm:$0xf]
    %v1111 = vld [vmem:[%s7 + $0x78] sm:$0xf]
    %v1112 = vld [vmem:[%s7 + $0x7c] sm:$0xf]
    %v1113 = vld [vmem:[#allocation2] sm:$0x1]
    %v1115 = vlaneseq
    %v1116 = vshrl.u32 %v1115, 7
    %v1117 = vsub.s32 0, %v1116
    %v1118 = vrot.slane %v1113, %v1117
    %v1152 = vunpack.c.l.b16 %v1081
    %v1153 = vunpack.c.l.b16 %v1082
    %v1154 = vunpack.c.l.b16 %v1083
    %v1155 = vunpack.c.l.b16 %v1084
    %v1156 = vunpack.c.l.b16 %v1085
    %v1157 = vunpack.c.l.b16 %v1086
    %v1158 = vunpack.c.l.b16 %v1087
    %v1159 = vunpack.c.l.b16 %v1088
    %v1160 = vunpack.c.l.b16 %v1089
    %v1161 = vunpack.c.l.b16 %v1090
    %v1162 = vunpack.c.l.b16 %v1091
    %v1163 = vunpack.c.l.b16 %v1092
    %v1164 = vunpack.c.l.b16 %v1093
    %v1165 = vunpack.c.l.b16 %v1094
    %v1166 = vunpack.c.l.b16 %v1095
    %v1167 = vunpack.c.l.b16 %v1096
    %v1168 = vunpack.c.l.b16 %v1097
    %v1169 = vunpack.c.l.b16 %v1098
    %v1170 = vunpack.c.l.b16 %v1099
    %v1171 = vunpack.c.l.b16 %v1100
    %v1172 = vunpack.c.l.b16 %v1101
    %v1173 = vunpack.c.l.b16 %v1102
    %v1174 = vunpack.c.l.b16 %v1103
    %v1175 = vunpack.c.l.b16 %v1104
    %v1176 = vunpack.c.l.b16 %v1105
    %v1177 = vunpack.c.l.b16 %v1106
    %v1178 = vunpack.c.l.b16 %v1107
    %v1179 = vunpack.c.l.b16 %v1108
    %v1180 = vunpack.c.l.b16 %v1109
    %v1181 = vunpack.c.l.b16 %v1110
    %v1182 = vunpack.c.l.b16 %v1111
    %v1183 = vunpack.c.l.b16 %v1112
    %v1184 = vpack.c.b16 %v1153, %v1152
    %v1185 = vpack.c.b16 %v1155, %v1154
    %v1186 = vpack.c.b16 %v1157, %v1156
    %v1187 = vpack.c.b16 %v1159, %v1158
    %v1188 = vpack.c.b16 %v1161, %v1160
    %v1189 = vpack.c.b16 %v1163, %v1162
    %v1190 = vpack.c.b16 %v1165, %v1164
    %v1191 = vpack.c.b16 %v1167, %v1166
    %v1192 = vpack.c.b16 %v1169, %v1168
    %v1193 = vpack.c.b16 %v1171, %v1170
    %v1194 = vpack.c.b16 %v1173, %v1172
    %v1195 = vpack.c.b16 %v1175, %v1174
    %v1196 = vpack.c.b16 %v1177, %v1176
    %v1197 = vpack.c.b16 %v1179, %v1178
    %v1198 = vpack.c.b16 %v1181, %v1180
    %v1199 = vpack.c.b16 %v1183, %v1182
    %1216 = vmatprep.subr.bf16.mxu0 0
    %1217 = vmatpush1.bf16.msra.mxu0 %v1184
    %1218 = vmatprep.subr.bf16.mxu0 0
    %1219 = vmatpush1.bf16.msra.mxu0 %v1185
    %1220 = vmatprep.subr.bf16.mxu0 0
    %1221 = vmatpush1.bf16.msra.mxu0 %v1186
    %1222 = vmatprep.subr.bf16.mxu0 0
    %1223 = vmatpush1.bf16.msra.mxu0 %v1187
    %1224 = vmatprep.subr.bf16.mxu0 0
    %1225 = vmatpush1.bf16.msra.mxu0 %v1188
    %1226 = vmatprep.subr.bf16.mxu0 0
    %1227 = vmatpush1.bf16.msra.mxu0 %v1189
    %1228 = vmatprep.subr.bf16.mxu0 0
    %1229 = vmatpush1.bf16.msra.mxu0 %v1190
    %1230 = vmatprep.subr.bf16.mxu0 0
    %1231 = vmatpush1.bf16.msra.mxu0 %v1191
    %1232 = vmatprep.subr.bf16.mxu0 0
    %1233 = vmatpush1.bf16.msra.mxu0 %v1192
    %1234 = vmatprep.subr.bf16.mxu0 0
    %1235 = vmatpush1.bf16.msra.mxu0 %v1193
    %1236 = vmatprep.subr.bf16.mxu0 0
    %1237 = vmatpush1.bf16.msra.mxu0 %v1194
    %1238 = vmatprep.subr.bf16.mxu0 0
    %1239 = vmatpush1.bf16.msra.mxu0 %v1195
    %1240 = vmatprep.subr.bf16.mxu0 0
    %1241 = vmatpush1.bf16.msra.mxu0 %v1196
    %1242 = vmatprep.subr.bf16.mxu0 0
    %1243 = vmatpush1.bf16.msra.mxu0 %v1197
    %1244 = vmatprep.subr.bf16.mxu0 0
    %1245 = vmatpush1.bf16.msra.mxu0 %v1198
    %1246 = vmatprep.subr.bf16.mxu0 0
    %1247 = vmatpush1.bf16.msra.mxu0 %v1199
    %1248 = vmatprep.mubr.bf16.mxu0 %v1080
    %1249 = vmatmul.mubr.bf16.gmra.mrb[0].mxu0 %v1079
    %v1250 = vpop.f32.mrb[0].mxu0
    %v1251 = vadd.f32 %v1118, %v1250
    %v1252 = vpop.f32.mrb[0].mxu0
    %v1253 = vpop.f32.mrb[0].mxu0
    %v1254 = vpop.f32.mrb[0].mxu0
    %1255 = vdwg.mxu0
    %v1256 = vxor.u32 %v1251, 2147483648
    %v1257 = vmul.f32 %v1256, 1.442695
    %v1258 = vpow.pop %v1257
    %v1259 = vadd.f32 %v1258, 1.0
    %v1260 = vrcp.pop %v1259
    %v1261 = vmul.f32 1.0, %v1260
    %vm1262 = vcmask 3072
    %1263 = vst.msk [vmem:[%s9] sm:$0xf] %vm1262, %v1261
    // Predicated region
    $region46: #{tpu_custom_call.1} parent=1 // pred_check
      _
    $region47: #{tpu_custom_call.1} parent=1 // pred_check_branch
      %1265 = sbr.rel (0) target = $region49
    $region48: #{tpu_custom_call.1} parent=1 // pred_region
      _
    $region49: #{tpu_custom_call.1} parent=1 // pred_fallthru
      _
    // Predicated region
    $region50: #{tpu_custom_call.1} parent=1 // pred_check
      _
    $region51: #{tpu_custom_call.1} parent=1 // pred_check_branch
      %1267 = sbr.rel (0) target = $region53
    $region52: #{tpu_custom_call.1} parent=1 // pred_region
      _
    $region53: #{tpu_custom_call.1} parent=1 // pred_fallthru
      _
    %1268 = vsyncpa [#allocation4], 1
    %1269 = vsyncpa [#allocation6], 1

</llo_original>
